<compile_context>
chip_gen: v5e
topology: v5e:2x2
jax: 0.10.0
libtpu: 0.0.40
codegen_flags: <defaults>
</compile_context>

<pallas_src>
import functools

import jax
import jax.numpy as jnp
from jax.experimental import pallas as pl
from jax.experimental.pallas import tpu as pltpu


# ---------------------------------------------------------------------------
# Kernel 1: batched input projection for BOTH directions (biases folded).
#   gi[d] = x @ w_ih[d] + b_proj[d]
# where b_proj[d] = [b_ih_r + b_hh_r, b_ih_z + b_hh_z, b_ih_n]  (per direction)
# ---------------------------------------------------------------------------
def input_proj_kernel(x_ref, w_ref, b_ref, gi_ref):
    x = x_ref[...]                                    # (R, D)
    for d in range(2):                                # unrolled at trace time
        gi_ref[d] = (jnp.dot(x, w_ref[d], preferred_element_type=jnp.float32)
                     + b_ref[d])


# ---------------------------------------------------------------------------
# Kernel 2: bidirectional GRU recurrence.
#   grid = (2 directions, T // chunk); `chunk` timesteps per grid step.
#   PyTorch gate order (r, z, n).  r/z biases were folded into gi; only the
#   hidden bias of the n gate (b_hn) remains in the per-step path.
# ---------------------------------------------------------------------------
def bigru_recurrent_kernel(gi_ref, w_hh_ref, b_hn_ref, out_ref, hidden_ref,
                           h_scr, *, chunk, hidden_size):
    d = pl.program_id(0)        # 0 = forward, 1 = backward
    c = pl.program_id(1)        # time-chunk index along this direction's order
    H = hidden_size

    @pl.when(c == 0)
    def _init():
        h_scr[...] = jnp.zeros_like(h_scr)

    w_hh = w_hh_ref[...]        # (H, 3H)
    b_hn = b_hn_ref[...]        # (1, H)

    def step(i, h):
        # local time index inside the chunk: i for fwd, chunk-1-i for bwd
        lt = i + d * (chunk - 1 - 2 * i)
        gi = gi_ref[lt]                                            # (B, 3H)
        gh = jnp.dot(h, w_hh, preferred_element_type=jnp.float32)  # (B, 3H)
        r = jax.nn.sigmoid(gi[:, 0:H] + gh[:, 0:H])
        z = jax.nn.sigmoid(gi[:, H:2 * H] + gh[:, H:2 * H])
        n = jnp.tanh(gi[:, 2 * H:] + r * (gh[:, 2 * H:] + b_hn))
        h_new = (1.0 - z) * n + z * h
        out_ref[lt] = h_new
        return h_new

    h_last = jax.lax.fori_loop(0, chunk, step, h_scr[...], unroll=True)
    h_scr[...] = h_last
    hidden_ref[...] = h_last    # resident block; flushed once per direction


# ---------------------------------------------------------------------------
# Kernel 3: embedding Linear, fused over the two directions (no concat).
#   y = fwd @ w_emb[:H] + bwd @ w_emb[H:] + b
# ---------------------------------------------------------------------------
def embedding_kernel(rec_ref, wf_ref, wb_ref, b_ref, out_ref):
    yf = jnp.dot(rec_ref[0], wf_ref[...], preferred_element_type=jnp.float32)
    yb = jnp.dot(rec_ref[1], wb_ref[...], preferred_element_type=jnp.float32)
    out_ref[...] = yf + yb + b_ref[...]


# ---------------------------------------------------------------------------
# Wrapper
# ---------------------------------------------------------------------------
def _pick_chunk(T, max_chunk=32):
    c = min(T, max_chunk)
    while T % c:
        c -= 1
    return c


def bidirectional_gru(x, params, *, max_chunk=32):
    T, B, D = x.shape
    H = params["w_hh_f"].shape[0]
    O = params["w_emb"].shape[1]
    H3 = 3 * H

    chunk = _pick_chunk(T, max_chunk)      # timesteps per recurrent grid step
    nc = T // chunk
    # Row-chunking for the dense GEMM kernels; keep the sublane dim 8-aligned
    # (or fall back to a single full block).
    row_chunk = chunk if ((chunk * B) % 8 == 0 or chunk == T) else T
    nrb = T // row_chunk
    R = row_chunk * B

    # ---- parameter preprocessing (trace-time, negligible) -------------------
    def fold(b_ih, b_hh):
        b_proj = jnp.concatenate(
            [b_ih[:, :2 * H] + b_hh[:, :2 * H], b_ih[:, 2 * H:]], axis=1)
        return b_proj, b_hh[:, 2 * H:]

    b_proj_f, b_hn_f = fold(params["b_ih_f"], params["b_hh_f"])
    b_proj_b, b_hn_b = fold(params["b_ih_b"], params["b_hh_b"])

    w_ih = jnp.stack([params["w_ih_f"], params["w_ih_b"]], axis=0)   # (2, D, 3H)
    b_proj = jnp.stack([b_proj_f, b_proj_b], axis=0)                 # (2, 1, 3H)
    w_hh = jnp.stack([params["w_hh_f"], params["w_hh_b"]], axis=0)   # (2, H, 3H)
    b_hn = jnp.stack([b_hn_f, b_hn_b], axis=0)                       # (2, 1, H)

    x_flat = x.reshape(T * B, D)                                     # free view

    # ---- Kernel 1: batched input projection ---------------------------------
    gi_flat = pl.pallas_call(
        input_proj_kernel,
        out_shape=jax.ShapeDtypeStruct((2, T * B, H3), jnp.float32),
        grid=(nrb,),
        in_specs=[
            pl.BlockSpec((R, D), lambda c: (c, 0)),
            pl.BlockSpec((2, D, H3), lambda c: (0, 0, 0)),
            pl.BlockSpec((2, 1, H3), lambda c: (0, 0, 0)),
        ],
        out_specs=pl.BlockSpec((2, R, H3), lambda c: (0, c, 0)),
        compiler_params=pltpu.CompilerParams(
            dimension_semantics=("parallel",)),
    )(x_flat, w_ih, b_proj)

    gi = gi_flat.reshape(2, T, B, H3)                                # free view

    # ---- Kernel 2: recurrence ------------------------------------------------
    out_dirs, hidden = pl.pallas_call(
        functools.partial(bigru_recurrent_kernel, chunk=chunk, hidden_size=H),
        out_shape=(
            jax.ShapeDtypeStruct((2, T, B, H), jnp.float32),   # per-dir outputs
            jax.ShapeDtypeStruct((2, B, H), jnp.float32),      # final hidden
        ),
        grid=(2, nc),
        in_specs=[
            pl.BlockSpec((None, chunk, B, H3),
                         lambda d, c: (d, c + d * (nc - 1 - 2 * c), 0, 0)),
            pl.BlockSpec((None, H, H3), lambda d, c: (d, 0, 0)),
            pl.BlockSpec((None, 1, H), lambda d, c: (d, 0, 0)),
        ],
        out_specs=(
            pl.BlockSpec((None, chunk, B, H),
                         lambda d, c: (d, c + d * (nc - 1 - 2 * c), 0, 0)),
            pl.BlockSpec((None, B, H), lambda d, c: (d, 0, 0)),
        ),
        scratch_shapes=[pltpu.VMEM((B, H), jnp.float32)],
        compiler_params=pltpu.CompilerParams(
            dimension_semantics=("parallel", "arbitrary")),
    )(gi, w_hh, b_hn)

    # ---- Kernel 3: embedding Linear (fused concat) ---------------------------
    rec_flat = out_dirs.reshape(2, T * B, H)                         # free view
    w_emb_f = params["w_emb"][:H]
    w_emb_b = params["w_emb"][H:]
    out_flat = pl.pallas_call(
        embedding_kernel,
        out_shape=jax.ShapeDtypeStruct((T * B, O), jnp.float32),
        grid=(nrb,),
        in_specs=[
            pl.BlockSpec((2, R, H), lambda c: (0, c, 0)),
            pl.BlockSpec((H, O), lambda c: (0, 0)),
            pl.BlockSpec((H, O), lambda c: (0, 0)),
            pl.BlockSpec((1, O), lambda c: (0, 0)),
        ],
        out_specs=pl.BlockSpec((R, O), lambda c: (c, 0)),
        compiler_params=pltpu.CompilerParams(
            dimension_semantics=("parallel",)),
    )(rec_flat, w_emb_f, w_emb_b, params["b_emb"])

    return out_flat.reshape(T, B, O), hidden


# ---------------------------------------------------------------------------
# Pure-JAX reference (lax.scan, unfolded biases) for verification
# ---------------------------------------------------------------------------
def _gru_dir_ref(x, w_ih, w_hh, b_ih, b_hh, H):
    def step(h, x_t):
        gi = x_t @ w_ih + b_ih
        gh = h @ w_hh + b_hh
        r = jax.nn.sigmoid(gi[:, :H] + gh[:, :H])
        z = jax.nn.sigmoid(gi[:, H:2 * H] + gh[:, H:2 * H])
        n = jnp.tanh(gi[:, 2 * H:] + r * gh[:, 2 * H:])
        h_new = (1.0 - z) * n + z * h
        return h_new, h_new

    h0 = jnp.zeros((x.shape[1], H), jnp.float32)
    h_last, ys = jax.lax.scan(step, h0, x)
    return ys, h_last


def bidirectional_gru_ref(x, params):
    T, B, D = x.shape
    H = params["w_hh_f"].shape[0]
    fwd, h_f = _gru_dir_ref(x, params["w_ih_f"], params["w_hh_f"],
                            params["b_ih_f"], params["b_hh_f"], H)
    bwd_rev, h_b = _gru_dir_ref(x[::-1], params["w_ih_b"], params["w_hh_b"],
                                params["b_ih_b"], params["b_hh_b"], H)
    bwd = bwd_rev[::-1]
    recurrent = jnp.concatenate([fwd, bwd], axis=-1)
    out = recurrent.reshape(T * B, 2 * H) @ params["w_emb"] + params["b_emb"]
    hidden = jnp.stack([h_f, h_b], axis=0)
    return out.reshape(T, B, -1), hidden


# ---------------------------------------------------------------------------
def init_params(key, input_size, hidden_size, output_size):
    k = 1.0 / jnp.sqrt(hidden_size)
    keys = jax.random.split(key, 10)

    def u(kk, shape, bound):
        return jax.random.uniform(kk, shape, jnp.float32, -bound, bound)

    H, D, O = hidden_size, input_size, output_size
    params = {
        # weights stored transposed relative to PyTorch: (in_features, 3H)
        "w_ih_f": u(keys[0], (D, 3 * H), k),
        "w_hh_f": u(keys[1], (H, 3 * H), k),
        "b_ih_f": u(keys[2], (1, 3 * H), k),
        "b_hh_f": u(keys[3], (1, 3 * H), k),
        "w_ih_b": u(keys[4], (D, 3 * H), k),
        "w_hh_b": u(keys[5], (H, 3 * H), k),
        "b_ih_b": u(keys[6], (1, 3 * H), k),
        "b_hh_b": u(keys[7], (1, 3 * H), k),
        # nn.Linear(2H, O): stored as (2H, O)
        "w_emb": u(keys[8], (2 * H, O), 1.0 / jnp.sqrt(2 * H)),
        "b_emb": u(keys[9], (1, O), 1.0 / jnp.sqrt(2 * H)),
    }
    return params


if __name__ == "__main__":
    T, B, D, H, O = 8, 2, 16, 32, 10

    key = jax.random.PRNGKey(0)
    k_x, k_p = jax.random.split(key)
    x = jax.random.normal(k_x, (T, B, D), dtype=jnp.float32)
    params = init_params(k_p, D, H, O)

    output, hidden = bidirectional_gru(x, params)
    output = jax.block_until_ready(output)
    hidden = jax.block_until_ready(hidden)

    out_ref, hid_ref = bidirectional_gru_ref(x, params)

    assert output.shape == (T, B, O), output.shape
    assert hidden.shape == (2, B, H), hidden.shape
    assert jnp.max(jnp.abs(output - out_ref)) < 1e-3, "output mismatch"
    assert jnp.max(jnp.abs(hidden - hid_ref)) < 1e-3, "hidden mismatch"

    print("KERNEL_OK")
</pallas_src>

<mosaic_0001>
module attributes {stable_mosaic.version = 11 : i64} {
  func.func @input_proj_kernel(%arg0: i32, %arg1: memref<16x16xf32, #tpu.memory_space<vmem>>, %arg2: memref<2x16x96xf32, #tpu.memory_space<vmem>>, %arg3: memref<2x1x96xf32, #tpu.memory_space<vmem>>, %arg4: memref<2x16x96xf32, #tpu.memory_space<vmem>>) attributes {dimension_semantics = [#tpu.dimension_semantics<parallel>], iteration_bounds = array<i64: 1>, scalar_prefetch = 0 : i64, scratch_operands = 0 : i64, tpu.core_type = #tpu.core_type<tc>, window_params = [{transform_indices = @transform_0, window_bounds = array<i64: 16, 16>}, {pipeline_mode = #tpu.pipeline_mode<synchronous>, transform_indices = @transform_1, window_bounds = array<i64: 2, 16, 96>}, {pipeline_mode = #tpu.pipeline_mode<synchronous>, transform_indices = @transform_2, window_bounds = array<i64: 2, 1, 96>}, {transform_indices = @transform_3, window_bounds = array<i64: 2, 16, 96>}]} {
    %c0 = arith.constant 0 : index
    %c0_0 = arith.constant 0 : index
    %0 = vector.load %arg1[%c0, %c0_0] : memref<16x16xf32, #tpu.memory_space<vmem>>, vector<16x16xf32>
    %c0_1 = arith.constant 0 : index
    %c0_2 = arith.constant 0 : index
    %c0_3 = arith.constant 0 : index
    %1 = vector.load %arg2[%c0_1, %c0_2, %c0_3] : memref<2x16x96xf32, #tpu.memory_space<vmem>>, vector<1x16x96xf32>
    %2 = vector.shape_cast %1 : vector<1x16x96xf32> to vector<16x96xf32>
    %cst = arith.constant dense<0.000000e+00> : vector<16x96xf32>
    %3 = tpu.matmul %0, %2, %cst {dimension_numbers = #tpu.dot_dimension_numbers<[1], [0], [0], [1], [0, 0, 1, 1], [], []>} : vector<16x16xf32>, vector<16x96xf32>, vector<16x96xf32> -> vector<16x96xf32>
    %c0_4 = arith.constant 0 : index
    %c0_5 = arith.constant 0 : index
    %c0_6 = arith.constant 0 : index
    %4 = vector.load %arg3[%c0_4, %c0_5, %c0_6] : memref<2x1x96xf32, #tpu.memory_space<vmem>>, vector<1x1x96xf32>
    %5 = vector.shape_cast %4 : vector<1x1x96xf32> to vector<1x96xf32>
    %6 = vector.broadcast %5 : vector<1x96xf32> to vector<16x96xf32>
    %7 = arith.addf %3, %6 : vector<16x96xf32>
    %c0_7 = arith.constant 0 : index
    %c0_8 = arith.constant 0 : index
    %c0_9 = arith.constant 0 : index
    %8 = vector.load %arg4[%c0_7, %c0_8, %c0_9] : memref<2x16x96xf32, #tpu.memory_space<vmem>>, vector<1x16x96xf32>
    %9 = vector.shape_cast %8 : vector<1x16x96xf32> to vector<16x96xf32>
    %10 = vector.shape_cast %7 : vector<16x96xf32> to vector<1x16x96xf32>
    tpu.vector_store %arg4[%c0_7, %c0_8, %c0_9], %10 {strides = array<i32>} : memref<2x16x96xf32, #tpu.memory_space<vmem>>, vector<1x16x96xf32>,
    %c1 = arith.constant 1 : index
    %c0_10 = arith.constant 0 : index
    %c0_11 = arith.constant 0 : index
    %11 = vector.load %arg2[%c1, %c0_10, %c0_11] : memref<2x16x96xf32, #tpu.memory_space<vmem>>, vector<1x16x96xf32>
    %12 = vector.shape_cast %11 : vector<1x16x96xf32> to vector<16x96xf32>
    %cst_12 = arith.constant dense<0.000000e+00> : vector<16x96xf32>
    %13 = tpu.matmul %0, %12, %cst_12 {dimension_numbers = #tpu.dot_dimension_numbers<[1], [0], [0], [1], [0, 0, 1, 1], [], []>} : vector<16x16xf32>, vector<16x96xf32>, vector<16x96xf32> -> vector<16x96xf32>
    %c1_13 = arith.constant 1 : index
    %c0_14 = arith.constant 0 : index
    %c0_15 = arith.constant 0 : index
    %14 = vector.load %arg3[%c1_13, %c0_14, %c0_15] : memref<2x1x96xf32, #tpu.memory_space<vmem>>, vector<1x1x96xf32>
    %15 = vector.shape_cast %14 : vector<1x1x96xf32> to vector<1x96xf32>
    %16 = vector.broadcast %15 : vector<1x96xf32> to vector<16x96xf32>
    %17 = arith.addf %13, %16 : vector<16x96xf32>
    %c1_16 = arith.constant 1 : index
    %c0_17 = arith.constant 0 : index
    %c0_18 = arith.constant 0 : index
    %18 = vector.load %arg4[%c1_16, %c0_17, %c0_18] : memref<2x16x96xf32, #tpu.memory_space<vmem>>, vector<1x16x96xf32>
    %19 = vector.shape_cast %18 : vector<1x16x96xf32> to vector<16x96xf32>
    %20 = vector.shape_cast %17 : vector<16x96xf32> to vector<1x16x96xf32>
    tpu.vector_store %arg4[%c1_16, %c0_17, %c0_18], %20 {strides = array<i32>} : memref<2x16x96xf32, #tpu.memory_space<vmem>>, vector<1x16x96xf32>,
    return
  }
  func.func @transform_0(%arg0: i32) -> (i32, i32) {
    %c0_i32 = arith.constant 0 : i32
    %c0_i32_0 = arith.constant 0 : i32
    return %arg0, %c0_i32 : i32, i32
  }
  func.func @transform_1(%arg0: i32) -> (i32, i32, i32) {
    %c0_i32 = arith.constant 0 : i32
    %c0_i32_0 = arith.constant 0 : i32
    %c0_i32_1 = arith.constant 0 : i32
    %c0_i32_2 = arith.constant 0 : i32
    return %c0_i32, %c0_i32_0, %c0_i32_1 : i32, i32, i32
  }
  func.func @transform_2(%arg0: i32) -> (i32, i32, i32) {
    %c0_i32 = arith.constant 0 : i32
    %c0_i32_0 = arith.constant 0 : i32
    %c0_i32_1 = arith.constant 0 : i32
    %c0_i32_2 = arith.constant 0 : i32
    return %c0_i32, %c0_i32_0, %c0_i32_1 : i32, i32, i32
  }
  func.func @transform_3(%arg0: i32) -> (i32, i32, i32) {
    %c0_i32 = arith.constant 0 : i32
    %c0_i32_0 = arith.constant 0 : i32
    %c0_i32_1 = arith.constant 0 : i32
    return %c0_i32, %arg0, %c0_i32_0 : i32, i32, i32
  }
}

</mosaic_0001>

<llo_original>
// kernel: tpu_custom_call.1
$region0: #{tpu_custom_call.1}
  #allocation0 [shape = 'u32[]', space=smem, size = 0x4, offset = 0x4, fixed_abs, tag = 'smem constant byte address 0x4 - core index']
  #allocation1 [shape = 'u32[72,128]{1,0:T(1,128)}', space=vmem, size = 0x9000, scoped, tag = 'internal scratch']
  %s0 = inlined_call_operand.hbm [shape: f32[16,16], index: 0, kind: input, shape index: {}]
  %s1 = inlined_call_operand.hbm [shape: f32[2,16,96], index: 1, kind: input, shape index: {}]
  %s2 = inlined_call_operand.hbm [shape: f32[2,1,96], index: 2, kind: input, shape index: {}]
  %s3 = inlined_call_operand.hbm [shape: f32[2,16,96], index: 3, kind: output, shape index: {}]
  %s4 = sld [smem:[#allocation0]]
  $region34: #{tpu_custom_call.1} parent=0
    _
  %s6 = ssub.s32 1, %s4
  %s7 = scalar_select 0, %s6, %s4
  $region1: #{tpu_custom_call.1} parent=0
    #allocation2 [shape = 'u8[8192]{0}', space=vmem, size = 0x2000, scoped, tag = 'input window, operand 0, single buffered']
    #allocation3 [shape = 's32[1]{0}', space=sflag, size = 0x4, scoped, tag = 'scoped memory for tpu_custom_call.1']
    #allocation4 [shape = 's32[1]{0}', space=sflag, size = 0x4, scoped, tag = 'scoped memory for tpu_custom_call.1']
    #allocation5 [shape = 'u8[16384]{0}', space=vmem, size = 0x4000, scoped, tag = 'input window, operand 1, single buffered']
    #allocation6 [shape = 's32[1]{0}', space=sflag, size = 0x4, scoped, tag = 'scoped memory for tpu_custom_call.1']
    #allocation7 [shape = 'u8[1024]{0}', space=vmem, size = 0x400, scoped, tag = 'input window, operand 2, single buffered']
    #allocation8 [shape = 'u8[16384]{0}', space=vmem, size = 0x4000, scoped, tag = 'output window, operand 0, single buffered']
    %8 = vsyncpa [#allocation3], 0
    %9 = vsyncpa [#allocation6], 0
    %10 = vsyncpa [#allocation4], 0
    // Predicated region
    $region2: #{tpu_custom_call.1} parent=1 // pred_check
      _
    $region3: #{tpu_custom_call.1} parent=1 // pred_check_branch
      %12 = sbr.rel (0) target = $region5
    $region4: #{tpu_custom_call.1} parent=1 // pred_region
      %14 = vsyncadd [#allocation3], 0
      %s15 = sshll.u32 %s0, 4
      %s16 = int_to_ptr.hbm [resolvable:$true] %s15
      %s17 = sshll.u32 [#allocation2], 4
      %s18 = int_to_ptr.vmem [resolvable:$true] %s17
      %23 = dma.hbm_to_vmem [thread:$0]  %s16, 256, %s18, [#allocation3], 128, 128, 8
    $region5: #{tpu_custom_call.1} parent=1 // pred_fallthru
      _
    // Predicated region
    $region6: #{tpu_custom_call.1} parent=1 // pred_check
      _
    $region7: #{tpu_custom_call.1} parent=1 // pred_check_branch
      %25 = sbr.rel (0) target = $region9
    $region8: #{tpu_custom_call.1} parent=1 // pred_region
      %27 = vsyncadd [#allocation6], 0
      %s28 = sshll.u32 %s1, 4
      %s29 = int_to_ptr.hbm [resolvable:$true] %s28
      %s30 = sshll.u32 [#allocation5], 4
      %s31 = int_to_ptr.vmem [resolvable:$true] %s30
      %36 = dma.hbm_to_vmem [thread:$0]  %s29, 512, %s31, [#allocation6], 128, 128, 8
    $region9: #{tpu_custom_call.1} parent=1 // pred_fallthru
      _
    // Predicated region
    $region10: #{tpu_custom_call.1} parent=1 // pred_check
      _
    $region11: #{tpu_custom_call.1} parent=1 // pred_check_branch
      %38 = sbr.rel (0) target = $region13
    $region12: #{tpu_custom_call.1} parent=1 // pred_region
      %40 = vsyncadd [#allocation6], 0
      %s41 = sshll.u32 %s2, 4
      %s42 = int_to_ptr.hbm [resolvable:$true] %s41
      %s43 = sshll.u32 [#allocation7], 4
      %s44 = int_to_ptr.vmem [resolvable:$true] %s43
      %49 = dma.hbm_to_vmem [thread:$0]  %s42, 32, %s44, [#allocation6], 16, 16, 1
    $region13: #{tpu_custom_call.1} parent=1 // pred_fallthru
      _
    // Predicated region
    $region14: #{tpu_custom_call.1} parent=1 // pred_check
      _
    $region15: #{tpu_custom_call.1} parent=1 // pred_check_branch
      %51 = sbr.rel (0) target = $region17
    $region16: #{tpu_custom_call.1} parent=1 // pred_region
      %53 = dma.done [#allocation3], 256
    $region17: #{tpu_custom_call.1} parent=1 // pred_fallthru
      _
    // Predicated region
    $region18: #{tpu_custom_call.1} parent=1 // pred_check
      _
    $region19: #{tpu_custom_call.1} parent=1 // pred_check_branch
      %55 = sbr.rel (0) target = $region21
    $region20: #{tpu_custom_call.1} parent=1 // pred_region
      %57 = dma.done [#allocation6], 512
    $region21: #{tpu_custom_call.1} parent=1 // pred_fallthru
      _
    // Predicated region
    $region22: #{tpu_custom_call.1} parent=1 // pred_check
      _
    $region23: #{tpu_custom_call.1} parent=1 // pred_check_branch
      %59 = sbr.rel (0) target = $region25
    $region24: #{tpu_custom_call.1} parent=1 // pred_region
      %61 = dma.done [#allocation6], 32
    $region25: #{tpu_custom_call.1} parent=1 // pred_fallthru
      _
    %v62 = vld [vmem:[#allocation2] sm:$0xff]
    %v63 = vld [vmem:[#allocation2 + $0x8] sm:$0xff]
    %v64 = vld [vmem:[#allocation5] sm:$0xff]
    %v65 = vld [vmem:[#allocation5 + $0x8] sm:$0xff]
    %v66 = vld [vmem:[#allocation7] sm:$0x1]
    %v68 = vperm.slane %v66, 0
    %vm70 = vcmask 130048
    %v72 = vsel %vm70, %v62, 0
    %v75 = vsel %vm70, %v63, 0
    %77 = vmatpush.msra.mxu0 0.0
    %78 = vmatpush.msra.mxu0 0.0
    %79 = vmatpush.msra.mxu0 0.0
    %80 = vmatpush.msra.mxu0 0.0
    %81 = vmatpush.msra.mxu0 0.0
    %82 = vmatpush.msra.mxu0 0.0
    %83 = vmatpush.msra.mxu0 0.0
    %84 = vmatpush.msra.mxu0 0.0
    %85 = vmatpush.msra.mxu0 0.0
    %86 = vmatpush.msra.mxu0 0.0
    %87 = vmatpush.msra.mxu0 0.0
    %88 = vmatpush.msra.mxu0 0.0
    %89 = vmatpush.msra.mxu0 0.0
    %90 = vmatpush.msra.mxu0 0.0
    %91 = vmatpush.msra.mxu0 %v65
    %92 = vmatpush.msra.mxu0 %v64
    %93 = vmatmul.f32.gmra.mxu0 %v72
    %v94 = vpop.f32.mrf.mxu0
    %v95 = vadd.f32 %v68, %v94
    %96 = vmatmul.f32.gmra.mxu0 %v75
    %v97 = vpop.f32.mrf.mxu0
    %v98 = vadd.f32 %v68, %v97
    %99 = vdwg.mxu0
    %vm100 = vcmask 785408
    %101 = vst.msk [vmem:[#allocation8] sm:$0xff] %vm100, %v95
    %102 = vst.msk [vmem:[#allocation8 + $0x8] sm:$0xff] %vm100, %v98
    %s103 = scalar_lea.vmem [#allocation5], 16
    %v104 = vld [vmem:[%s103] sm:$0xff]
    %v105 = vld [vmem:[%s103 + $0x8] sm:$0xff]
    %s106 = scalar_lea.vmem [#allocation7], 1
    %v107 = vld [vmem:[%s106] sm:$0x1]
    %v109 = vperm.slane %v107, 0
    %111 = vmatpush.msra.mxu0 0.0
    %112 = vmatpush.msra.mxu0 0.0
    %113 = vmatpush.msra.mxu0 0.0
    %114 = vmatpush.msra.mxu0 0.0
    %115 = vmatpush.msra.mxu0 0.0
    %116 = vmatpush.msra.mxu0 0.0
    %117 = vmatpush.msra.mxu0 0.0
    %118 = vmatpush.msra.mxu0 0.0
    %119 = vmatpush.msra.mxu0 0.0
    %120 = vmatpush.msra.mxu0 0.0
    %121 = vmatpush.msra.mxu0 0.0
    %122 = vmatpush.msra.mxu0 0.0
    %123 = vmatpush.msra.mxu0 0.0
    %124 = vmatpush.msra.mxu0 0.0
    %125 = vmatpush.msra.mxu0 %v105
    %126 = vmatpush.msra.mxu0 %v104
    %127 = vmatmul.f32.gmra.mxu0 %v72
    %v128 = vpop.f32.mrf.mxu0
    %v129 = vadd.f32 %v109, %v128
    %130 = vmatmul.f32.gmra.mxu0 %v75
    %v131 = vpop.f32.mrf.mxu0
    %v132 = vadd.f32 %v109, %v131
    %133 = vdwg.mxu0
    %s134 = scalar_lea.vmem [#allocation8], 16
    %135 = vst.msk [vmem:[%s134] sm:$0xff] %vm100, %v129
    %136 = vst.msk [vmem:[%s134 + $0x8] sm:$0xff] %vm100, %v132
    // Predicated region
    $region26: #{tpu_custom_call.1} parent=1 // pred_check
      _
    $region27: #{tpu_custom_call.1} parent=1 // pred_check_branch
      %138 = sbr.rel (0) target = $region29
    $region28: #{tpu_custom_call.1} parent=1 // pred_region
      %140 = vsyncadd [#allocation4], 0
      %s141 = sshll.u32 [#allocation8], 4
      %s142 = int_to_ptr.vmem [resolvable:$true] %s141
      %s143 = sshll.u32 %s3, 4
      %s144 = int_to_ptr.hbm [resolvable:$true] %s143
      %149 = dma.vmem_to_hbm [thread:$0]  %s142, 512, %s144, [#allocation4], 128, 128, 8
    $region29: #{tpu_custom_call.1} parent=1 // pred_fallthru
      _
    // Predicated region
    $region30: #{tpu_custom_call.1} parent=1 // pred_check
      _
    $region31: #{tpu_custom_call.1} parent=1 // pred_check_branch
      %151 = sbr.rel (0) target = $region33
    $region32: #{tpu_custom_call.1} parent=1 // pred_region
      %153 = dma.done [#allocation4], 512
    $region33: #{tpu_custom_call.1} parent=1 // pred_fallthru
      _
    %154 = vsyncpa [#allocation3], 1
    %155 = vsyncpa [#allocation6], 1
    %156 = vsyncpa [#allocation4], 1

</llo_original>
